<compile_context>
chip_gen: v7x
topology: tpu7x:2x2x1
jax: 0.10.0
libtpu: 0.0.40
codegen_flags: <defaults>
</compile_context>

<pallas_src>
import math

import jax
import jax.numpy as jnp
from jax import lax
from jax.experimental import pallas as pl
from jax.experimental.pallas import tpu as pltpu


# --------------------------------------------------------------------------
# pass 1: RMSNorm1 + QKV projections + RoPE (once per position)
# --------------------------------------------------------------------------
def _make_proj_kernel(num_heads: int, d_head: int, tile_s: int, eps: float):
    dh2 = d_head // 2

    def kernel(x_ref, g1_ref, wq_ref, wk_ref, wv_ref, cos_ref, sin_ref,
               q_ref, k_ref, v_ref):
        s0 = pl.multiple_of(pl.program_id(1) * tile_s, tile_s)

        x = x_ref[...]                                       # (TS, D) f32
        xn = x * lax.rsqrt(jnp.mean(x * x, axis=-1, keepdims=True) + eps) * g1_ref[...]
        xn_b = xn.astype(jnp.bfloat16)

        # MXU projections (scale already folded into wq offline)
        q = jnp.dot(xn_b, wq_ref[...], preferred_element_type=jnp.float32)
        k = jnp.dot(xn_b, wk_ref[...], preferred_element_type=jnp.float32)
        v_ref[...] = jnp.dot(xn_b, wv_ref[...],
                             preferred_element_type=jnp.float32).astype(jnp.bfloat16)

        cos_t = cos_ref[pl.ds(s0, tile_s), :]                # (TS, d_head/2) f32
        sin_t = sin_ref[pl.ds(s0, tile_s), :]

        # RoPE rotate-half (VPU only); wq/wk columns pre-permuted to [even|odd]
        for h in range(num_heads):                           # static, cheap (once/pos)
            a0 = h * d_head
            b0 = a0 + dh2
            c0 = a0 + d_head
            qa, qb = q[:, a0:b0], q[:, b0:c0]
            ka, kb = k[:, a0:b0], k[:, b0:c0]
            q_ref[:, a0:b0] = (qa * cos_t - qb * sin_t).astype(jnp.bfloat16)
            q_ref[:, b0:c0] = (qb * cos_t + qa * sin_t).astype(jnp.bfloat16)
            k_ref[:, a0:b0] = (ka * cos_t - kb * sin_t).astype(jnp.bfloat16)
            k_ref[:, b0:c0] = (kb * cos_t + ka * sin_t).astype(jnp.bfloat16)

    return kernel


# --------------------------------------------------------------------------
# pass 2: causal flash attention + output proj + residual + RMSNorm2 + SwiGLU
# --------------------------------------------------------------------------
def _make_attn_ffn_kernel(num_heads: int, d_head: int, tile_q: int, eps: float):
    dims = (((1,), (1,)), ((), ()))                          # contract last dims

    def kernel(x_ref, q_ref, k_ref, v_ref, g2_ref, wo_ref, w1_ref, w2_ref, w3_ref,
               o_ref, attn_sc):
        qi = pl.program_id(1)
        q0 = pl.multiple_of(qi * tile_q, tile_q)

        x_t = x_ref[...]                                     # (TQ, D) f32 residual
        q_all = q_ref[...]                                   # (TQ, D) bf16 (RoPE'd, scaled)

        row = q0 + lax.broadcasted_iota(jnp.int32, (tile_q, tile_q), 0)
        col = lax.broadcasted_iota(jnp.int32, (tile_q, tile_q), 1)
        neg = jnp.float32(-1e30)

        for h in range(num_heads):                           # static loop, H small
            a0 = h * d_head
            c0 = a0 + d_head
            qh = q_all[:, a0:c0]                             # (TQ, dh) bf16, contiguous

            def body(blk, carry):
                m, l, acc = carry
                k0 = pl.multiple_of(blk * tile_q, tile_q)
                kh = k_ref[pl.ds(k0, tile_q), a0:c0]         # (TK, dh) bf16
                vh = v_ref[pl.ds(k0, tile_q), a0:c0]
                # single full-width K = d_head contraction per head
                s = lax.dot_general(qh, kh, dims, preferred_element_type=jnp.float32)
                s = jnp.where(k0 + col <= row, s, neg)       # causal (padding masked too)
                m_new = jnp.maximum(m, jnp.max(s, axis=-1, keepdims=True))
                alpha = jnp.exp(m - m_new)
                p = jnp.exp(s - m_new)
                l_new = alpha * l + jnp.sum(p, axis=-1, keepdims=True)
                acc_new = alpha * acc + jnp.dot(p.astype(jnp.bfloat16), vh,
                                                preferred_element_type=jnp.float32)
                return m_new, l_new, acc_new

            init = (jnp.full((tile_q, 1), -1e30, jnp.float32),
                    jnp.zeros((tile_q, 1), jnp.float32),
                    jnp.zeros((tile_q, d_head), jnp.float32))
            # causality: only key blocks 0..qi are ever touched
            m, l, acc = lax.fori_loop(0, qi + 1, body, init)

            # normalised, already-bf16 per-head output into bf16 scratch
            attn_sc[:, a0:c0] = (acc * pl.reciprocal(l, approx=True)).astype(jnp.bfloat16)

        # output projection + residual
        attn = jnp.dot(attn_sc[...], wo_ref[...], preferred_element_type=jnp.float32)
        y = x_t + attn

        # RMSNorm2 + SwiGLU FFN
        yn = y * lax.rsqrt(jnp.mean(y * y, axis=-1, keepdims=True) + eps) * g2_ref[...]
        yn_b = yn.astype(jnp.bfloat16)
        h1 = jnp.dot(yn_b, w1_ref[...], preferred_element_type=jnp.float32)
        h3 = jnp.dot(yn_b, w3_ref[...], preferred_element_type=jnp.float32)
        gate = (h1 * jax.nn.sigmoid(h1) * h3).astype(jnp.bfloat16)
        ffn = jnp.dot(gate, w2_ref[...], preferred_element_type=jnp.float32)

        o_ref[...] = (y + ffn).astype(o_ref.dtype)

    return kernel


# --------------------------------------------------------------------------
# one-time parameter preparation (outside the hot path)
# --------------------------------------------------------------------------
def _head_permutation(d_model: int, num_heads: int):
    """Per-head output-column permutation: [even features | odd features]."""
    d_head = d_model // num_heads
    perm = []
    for h in range(num_heads):
        base = h * d_head
        perm.extend(range(base, base + d_head, 2))
        perm.extend(range(base + 1, base + d_head, 2))
    return jnp.asarray(perm, dtype=jnp.int32)


def prepare_params(params, *, num_heads: int):
    """Transpose weights to [in, out], permute wq/wk columns to the half-rotate
    RoPE layout, fold 1/sqrt(d_head) into wq, cast matmul weights to bf16."""
    D = params["wq"].shape[0]
    assert D % num_heads == 0
    d_head = D // num_heads
    assert d_head % 2 == 0
    perm = _head_permutation(D, num_heads)
    scale = 1.0 / math.sqrt(d_head)
    bf = jnp.bfloat16
    return {
        "g1": params["g1"].reshape(1, D).astype(jnp.float32),
        "g2": params["g2"].reshape(1, D).astype(jnp.float32),
        "wq": (params["wq"].T[:, perm] * scale).astype(bf),   # scale folded in
        "wk": params["wk"].T[:, perm].astype(bf),
        "wv": params["wv"].T.astype(bf),
        "wo": params["wo"].T.astype(bf),
        "w1": params["w1"].T.astype(bf),
        "w2": params["w2"].T.astype(bf),
        "w3": params["w3"].T.astype(bf),
    }


# --------------------------------------------------------------------------
# VMEM budget helper (re-derived per chip generation)
# --------------------------------------------------------------------------
def _vmem_limit_bytes(need_bytes: int) -> int:
    try:
        cap = pltpu.get_tpu_info().vmem_capacity_bytes       # 128 MiB v5e/v6e, 64 MiB v7x
    except Exception:
        cap = 64 << 20                                       # conservative (v7x) fallback
    # headroom for compiler-internal scratch / semaphores; never below 32 MiB,
    # never above 3/4 of physical VMEM.
    return int(min(max(need_bytes + (8 << 20), 32 << 20), cap * 3 // 4))


# --------------------------------------------------------------------------
# wrapper
# --------------------------------------------------------------------------
def transformer_block(x, prep, *, num_heads: int, theta: float = 10000.0,
                      out_dtype=None, eps: float = 1e-5):
    B, S, D = x.shape
    assert D % num_heads == 0
    d_head = D // num_heads
    assert d_head % 2 == 0
    if out_dtype is None:
        out_dtype = x.dtype

    # tile selection: 128 for long sequences (pad S up), else round S up to 8
    tile = 128 if S >= 128 else max(8, -(-S // 8) * 8)
    S_pad = -(-S // tile) * tile
    x_p = x if S_pad == S else jnp.pad(x, ((0, 0), (0, S_pad - S), (0, 0)))
    n_tiles = S_pad // tile

    # RoPE tables (S_pad, d_head//2): shared by every head
    pos = jnp.arange(S_pad, dtype=jnp.float32)[:, None]
    inv_freq = theta ** (-jnp.arange(0, d_head, 2, dtype=jnp.float32) / d_head)
    ang = pos * inv_freq[None, :]
    cos, sin = jnp.cos(ang), jnp.sin(ang)

    def act_spec():      # (tile, D) activation block, batch dim squeezed
        return pl.BlockSpec((None, tile, D), lambda b, i: (b, i, 0))

    def vmem_spec():     # grid-invariant: whole array resident in VMEM (single copy)
        return pl.BlockSpec(memory_space=pltpu.MemorySpace.VMEM)

    # ---- pass 1: K/V/Q projections + RoPE, once per position ----
    qkv_sds = jax.ShapeDtypeStruct((B, S_pad, D), jnp.bfloat16)
    resident1 = D * 4 + 3 * D * D * 2 + 2 * S_pad * (d_head // 2) * 4
    pipelined1 = 2 * (tile * D * 4 + 3 * tile * D * 2)
    q_rot, k_rot, v = pl.pallas_call(
        _make_proj_kernel(num_heads, d_head, tile, eps),
        out_shape=(qkv_sds, qkv_sds, qkv_sds),
        grid=(B, n_tiles),
        in_specs=[act_spec()] + [vmem_spec()] * 6,
        out_specs=(act_spec(), act_spec(), act_spec()),
        compiler_params=pltpu.CompilerParams(
            dimension_semantics=("parallel", "parallel"),
            vmem_limit_bytes=_vmem_limit_bytes(resident1 + pipelined1)),
    )(x_p, prep["g1"], prep["wq"], prep["wk"], prep["wv"], cos, sin)

    # ---- pass 2: causal flash attention + wo + residual + RMSNorm2 + SwiGLU ----
    Fd = prep["w1"].shape[1]
    out_bpe = jnp.dtype(out_dtype).itemsize
    resident2 = D * 4 + D * D * 2 + 3 * D * Fd * 2
    pipelined2 = 2 * (tile * D * 4 + tile * D * 2 + 2 * S_pad * D * 2 + tile * D * out_bpe)
    scratch2 = tile * D * 2
    out = pl.pallas_call(
        _make_attn_ffn_kernel(num_heads, d_head, tile, eps),
        out_shape=jax.ShapeDtypeStruct((B, S_pad, D), out_dtype),
        grid=(B, n_tiles),
        in_specs=[act_spec(),                                    # x residual tile (f32)
                  act_spec(),                                    # q_rot tile (bf16)
                  pl.BlockSpec((None, S_pad, D), lambda b, i: (b, 0, 0)),   # k_rot (per batch)
                  pl.BlockSpec((None, S_pad, D), lambda b, i: (b, 0, 0))]   # v      (per batch)
                 + [vmem_spec()] * 5,
        out_specs=act_spec(),
        scratch_shapes=[pltpu.VMEM((tile, D), jnp.bfloat16)],    # bf16 per-head attn scratch
        compiler_params=pltpu.CompilerParams(
            dimension_semantics=("parallel", "parallel"),
            vmem_limit_bytes=_vmem_limit_bytes(resident2 + pipelined2 + scratch2)),
    )(x_p, q_rot, k_rot, v, prep["g2"], prep["wo"], prep["w1"], prep["w2"], prep["w3"])

    return out if S_pad == S else out[:, :S, :]


# --------------------------------------------------------------------------
# pure-JAX f32 reference (original layout / interleaved RoPE) for correctness
# --------------------------------------------------------------------------
def _rmsnorm_ref(x, g, eps=1e-5):
    return x * jax.lax.rsqrt(jnp.mean(x * x, axis=-1, keepdims=True) + eps) * g


def _rope_ref(t, theta):
    B, S, H, Dh = t.shape
    pos = jnp.arange(S, dtype=jnp.float32)[:, None]
    inv = theta ** (-jnp.arange(0, Dh, 2, dtype=jnp.float32) / Dh)
    ang = pos * inv[None, :]
    c = jnp.cos(ang)[None, :, None, :]
    s = jnp.sin(ang)[None, :, None, :]
    t1, t2 = t[..., 0::2], t[..., 1::2]
    o1 = t1 * c - t2 * s
    o2 = t1 * s + t2 * c
    return jnp.stack([o1, o2], axis=-1).reshape(t.shape)


def transformer_ref(x, params, num_heads, theta=10000.0):
    B, S, D = x.shape
    dh = D // num_heads
    xn = _rmsnorm_ref(x, params["g1"])
    q = (xn @ params["wq"].T).reshape(B, S, num_heads, dh)
    k = (xn @ params["wk"].T).reshape(B, S, num_heads, dh)
    v = (xn @ params["wv"].T).reshape(B, S, num_heads, dh)
    q = _rope_ref(q, theta).transpose(0, 2, 1, 3)
    k = _rope_ref(k, theta).transpose(0, 2, 1, 3)
    v = v.transpose(0, 2, 1, 3)
    s = jnp.einsum("bhqd,bhkd->bhqk", q, k) / math.sqrt(dh)
    mask = jnp.tril(jnp.ones((S, S), bool))
    s = jnp.where(mask, s, -jnp.inf)
    p = jax.nn.softmax(s, axis=-1)
    o = jnp.einsum("bhqk,bhkd->bhqd", p, v).transpose(0, 2, 1, 3).reshape(B, S, D)
    y = x + o @ params["wo"].T
    yn = _rmsnorm_ref(y, params["g2"])
    h1 = yn @ params["w1"].T
    h3 = yn @ params["w3"].T
    return y + (h1 * jax.nn.sigmoid(h1) * h3) @ params["w2"].T


def _make_params(key, D, F, w_scale):
    ks = jax.random.split(key, 7)
    return {
        "g1": jnp.ones((D,), jnp.float32),
        "g2": jnp.ones((D,), jnp.float32),
        "wq": w_scale * jax.random.normal(ks[0], (D, D), jnp.float32),
        "wk": w_scale * jax.random.normal(ks[1], (D, D), jnp.float32),
        "wv": w_scale * jax.random.normal(ks[2], (D, D), jnp.float32),
        "wo": w_scale * jax.random.normal(ks[3], (D, D), jnp.float32),
        "w1": w_scale * jax.random.normal(ks[4], (F, D), jnp.float32),
        "w2": w_scale * jax.random.normal(ks[5], (D, F), jnp.float32),
        "w3": w_scale * jax.random.normal(ks[6], (F, D), jnp.float32),
    }


# --------------------------------------------------------------------------
# test
# --------------------------------------------------------------------------
if __name__ == "__main__":
    key = jax.random.PRNGKey(0)
    k_small, k_big = jax.random.split(key, 2)

    # ---- small shape (single tile) ----
    B, S, D, H, F = 2, 8, 32, 4, 64
    kp, kx = jax.random.split(k_small)
    params = _make_params(kp, D, F, 0.05)
    x = jax.random.normal(kx, (B, S, D), jnp.float32)
    prep = prepare_params(params, num_heads=H)               # one-time weight prep
    out = transformer_block(x, prep, num_heads=H)
    jax.block_until_ready(out)
    ref = transformer_ref(x, params, H)
    err = float(jnp.max(jnp.abs(out - ref)))
    # bf16 MXU matmuls + approx reciprocal vs f32 reference -> loosened tolerance
    assert jnp.allclose(out, ref, atol=2e-2, rtol=2e-2), f"small: max abs err {err}"

    # ---- larger shape: exercises multiple query tiles, padding, flash loop ----
    B2, S2, D2, H2, F2 = 1, 200, 128, 4, 256
    kp2, kx2 = jax.random.split(k_big)
    params2 = _make_params(kp2, D2, F2, 0.02)
    x2 = jax.random.normal(kx2, (B2, S2, D2), jnp.float32)
    prep2 = prepare_params(params2, num_heads=H2)
    out2 = transformer_block(x2, prep2, num_heads=H2)
    jax.block_until_ready(out2)
    ref2 = transformer_ref(x2, params2, H2)
    err2 = float(jnp.max(jnp.abs(out2 - ref2)))
    assert jnp.allclose(out2, ref2, atol=2e-2, rtol=2e-2), f"large: max abs err {err2}"

    print("KERNEL_OK")
</pallas_src>

<mosaic_0001>
module attributes {stable_mosaic.version = 11 : i64} {
  func.func @kernel(%arg0: i32, %arg1: i32, %arg2: memref<1x8x32xf32, #tpu.memory_space<vmem>>, %arg3: memref<1x32xf32, #tpu.memory_space<vmem>>, %arg4: memref<32x32xbf16, #tpu.memory_space<vmem>>, %arg5: memref<32x32xbf16, #tpu.memory_space<vmem>>, %arg6: memref<32x32xbf16, #tpu.memory_space<vmem>>, %arg7: memref<8x4xf32, #tpu.memory_space<vmem>>, %arg8: memref<8x4xf32, #tpu.memory_space<vmem>>, %arg9: memref<1x8x32xbf16, #tpu.memory_space<vmem>>, %arg10: memref<1x8x32xbf16, #tpu.memory_space<vmem>>, %arg11: memref<1x8x32xbf16, #tpu.memory_space<vmem>>) attributes {dimension_semantics = [#tpu.dimension_semantics<parallel>, #tpu.dimension_semantics<parallel>], iteration_bounds = array<i64: 2, 1>, scalar_prefetch = 0 : i64, scratch_operands = 0 : i64, tpu.core_type = #tpu.core_type<tc>, window_params = [{transform_indices = @transform_0, window_bounds = array<i64: 1, 8, 32>}, {pipeline_mode = #tpu.pipeline_mode<synchronous>, transform_indices = @transform_1, window_bounds = array<i64: 1, 32>}, {pipeline_mode = #tpu.pipeline_mode<synchronous>, transform_indices = @transform_2, window_bounds = array<i64: 32, 32>}, {pipeline_mode = #tpu.pipeline_mode<synchronous>, transform_indices = @transform_3, window_bounds = array<i64: 32, 32>}, {pipeline_mode = #tpu.pipeline_mode<synchronous>, transform_indices = @transform_4, window_bounds = array<i64: 32, 32>}, {pipeline_mode = #tpu.pipeline_mode<synchronous>, transform_indices = @transform_5, window_bounds = array<i64: 8, 4>}, {pipeline_mode = #tpu.pipeline_mode<synchronous>, transform_indices = @transform_6, window_bounds = array<i64: 8, 4>}, {transform_indices = @transform_7, window_bounds = array<i64: 1, 8, 32>}, {transform_indices = @transform_8, window_bounds = array<i64: 1, 8, 32>}, {transform_indices = @transform_9, window_bounds = array<i64: 1, 8, 32>}]} {
    %c8_i32 = arith.constant 8 : i32
    %0 = arith.muli %arg1, %c8_i32 : i32
    %1 = tpu.assume_multiple %0, 8 : i32
    %c0 = arith.constant 0 : index
    %c0_0 = arith.constant 0 : index
    %c0_1 = arith.constant 0 : index
    %2 = vector.load %arg2[%c0, %c0_0, %c0_1] : memref<1x8x32xf32, #tpu.memory_space<vmem>>, vector<1x8x32xf32>
    %3 = vector.shape_cast %2 : vector<1x8x32xf32> to vector<8x32xf32>
    %4 = arith.mulf %3, %3 : vector<8x32xf32>
    %cst = arith.constant dense<0.000000e+00> : vector<8xf32>
    %5 = vector.multi_reduction <add>, %4, %cst [1] : vector<8x32xf32> to vector<8xf32>
    %6 = vector.shape_cast %5 : vector<8xf32> to vector<8x1xf32>
    %cst_2 = arith.constant 3.200000e+01 : f32
    %7 = vector.broadcast %cst_2 : f32 to vector<8x1xf32>
    %8 = arith.divf %6, %7 : vector<8x1xf32>
    %cst_3 = arith.constant 9.99999974E-6 : f32
    %9 = vector.broadcast %cst_3 : f32 to vector<8x1xf32>
    %10 = arith.addf %8, %9 : vector<8x1xf32>
    %11 = math.rsqrt %10 : vector<8x1xf32>
    %12 = vector.broadcast %11 : vector<8x1xf32> to vector<8x32xf32>
    %13 = arith.mulf %3, %12 : vector<8x32xf32>
    %c0_4 = arith.constant 0 : index
    %c0_5 = arith.constant 0 : index
    %14 = vector.load %arg3[%c0_4, %c0_5] : memref<1x32xf32, #tpu.memory_space<vmem>>, vector<1x32xf32>
    %15 = vector.broadcast %14 : vector<1x32xf32> to vector<8x32xf32>
    %16 = arith.mulf %13, %15 : vector<8x32xf32>
    %17 = arith.truncf %16 : vector<8x32xf32> to vector<8x32xbf16>
    %c0_6 = arith.constant 0 : index
    %c0_7 = arith.constant 0 : index
    %18 = vector.load %arg4[%c0_6, %c0_7] : memref<32x32xbf16, #tpu.memory_space<vmem>>, vector<32x32xbf16>
    %cst_8 = arith.constant dense<0.000000e+00> : vector<8x32xf32>
    %19 = tpu.matmul %17, %18, %cst_8 {dimension_numbers = #tpu.dot_dimension_numbers<[1], [0], [0], [1], [0, 0, 1, 1], [], []>} : vector<8x32xbf16>, vector<32x32xbf16>, vector<8x32xf32> -> vector<8x32xf32>
    %c0_9 = arith.constant 0 : index
    %c0_10 = arith.constant 0 : index
    %20 = vector.load %arg5[%c0_9, %c0_10] : memref<32x32xbf16, #tpu.memory_space<vmem>>, vector<32x32xbf16>
    %cst_11 = arith.constant dense<0.000000e+00> : vector<8x32xf32>
    %21 = tpu.matmul %17, %20, %cst_11 {dimension_numbers = #tpu.dot_dimension_numbers<[1], [0], [0], [1], [0, 0, 1, 1], [], []>} : vector<8x32xbf16>, vector<32x32xbf16>, vector<8x32xf32> -> vector<8x32xf32>
    %c0_12 = arith.constant 0 : index
    %c0_13 = arith.constant 0 : index
    %22 = vector.load %arg6[%c0_12, %c0_13] : memref<32x32xbf16, #tpu.memory_space<vmem>>, vector<32x32xbf16>
    %cst_14 = arith.constant dense<0.000000e+00> : vector<8x32xf32>
    %23 = tpu.matmul %17, %22, %cst_14 {dimension_numbers = #tpu.dot_dimension_numbers<[1], [0], [0], [1], [0, 0, 1, 1], [], []>} : vector<8x32xbf16>, vector<32x32xbf16>, vector<8x32xf32> -> vector<8x32xf32>
    %24 = arith.truncf %23 : vector<8x32xf32> to vector<8x32xbf16>
    %c0_15 = arith.constant 0 : index
    %c0_16 = arith.constant 0 : index
    %c0_17 = arith.constant 0 : index
    %25 = vector.load %arg11[%c0_15, %c0_16, %c0_17] : memref<1x8x32xbf16, #tpu.memory_space<vmem>>, vector<1x8x32xbf16>
    %26 = vector.shape_cast %25 : vector<1x8x32xbf16> to vector<8x32xbf16>
    %27 = vector.shape_cast %24 : vector<8x32xbf16> to vector<1x8x32xbf16>
    tpu.vector_store %arg11[%c0_15, %c0_16, %c0_17], %27 {strides = array<i32>} : memref<1x8x32xbf16, #tpu.memory_space<vmem>>, vector<1x8x32xbf16>,
    %28 = arith.index_cast %1 : i32 to index
    %c0_18 = arith.constant 0 : index
    %29 = vector.load %arg7[%28, %c0_18] : memref<8x4xf32, #tpu.memory_space<vmem>>, vector<8x4xf32>
    %30 = arith.index_cast %1 : i32 to index
    %c0_19 = arith.constant 0 : index
    %31 = vector.load %arg8[%30, %c0_19] : memref<8x4xf32, #tpu.memory_space<vmem>>, vector<8x4xf32>
    %32 = vector.extract_strided_slice %19 {offsets = [0, 0], sizes = [8, 4], strides = [1, 1]} : vector<8x32xf32> to vector<8x4xf32>
    %33 = vector.extract_strided_slice %19 {offsets = [0, 4], sizes = [8, 4], strides = [1, 1]} : vector<8x32xf32> to vector<8x4xf32>
    %34 = vector.extract_strided_slice %21 {offsets = [0, 0], sizes = [8, 4], strides = [1, 1]} : vector<8x32xf32> to vector<8x4xf32>
    %35 = vector.extract_strided_slice %21 {offsets = [0, 4], sizes = [8, 4], strides = [1, 1]} : vector<8x32xf32> to vector<8x4xf32>
    %36 = arith.mulf %32, %29 : vector<8x4xf32>
    %37 = arith.mulf %33, %31 : vector<8x4xf32>
    %38 = arith.subf %36, %37 : vector<8x4xf32>
    %39 = arith.truncf %38 : vector<8x4xf32> to vector<8x4xbf16>
    %c0_20 = arith.constant 0 : index
    %c0_21 = arith.constant 0 : index
    %c0_22 = arith.constant 0 : index
    %40 = vector.load %arg9[%c0_20, %c0_21, %c0_22] : memref<1x8x32xbf16, #tpu.memory_space<vmem>>, vector<1x8x4xbf16>
    %41 = vector.shape_cast %40 : vector<1x8x4xbf16> to vector<8x4xbf16>
    %42 = vector.shape_cast %39 : vector<8x4xbf16> to vector<1x8x4xbf16>
    tpu.vector_store %arg9[%c0_20, %c0_21, %c0_22], %42 {strides = array<i32>} : memref<1x8x32xbf16, #tpu.memory_space<vmem>>, vector<1x8x4xbf16>,
    %43 = arith.mulf %33, %29 : vector<8x4xf32>
    %44 = arith.mulf %32, %31 : vector<8x4xf32>
    %45 = arith.addf %43, %44 : vector<8x4xf32>
    %46 = arith.truncf %45 : vector<8x4xf32> to vector<8x4xbf16>
    %c0_23 = arith.constant 0 : index
    %c0_24 = arith.constant 0 : index
    %c4 = arith.constant 4 : index
    %47 = vector.load %arg9[%c0_23, %c0_24, %c4] : memref<1x8x32xbf16, #tpu.memory_space<vmem>>, vector<1x8x4xbf16>
    %48 = vector.shape_cast %47 : vector<1x8x4xbf16> to vector<8x4xbf16>
    %49 = vector.shape_cast %46 : vector<8x4xbf16> to vector<1x8x4xbf16>
    tpu.vector_store %arg9[%c0_23, %c0_24, %c4], %49 {strides = array<i32>} : memref<1x8x32xbf16, #tpu.memory_space<vmem>>, vector<1x8x4xbf16>,
    %50 = arith.mulf %34, %29 : vector<8x4xf32>
    %51 = arith.mulf %35, %31 : vector<8x4xf32>
    %52 = arith.subf %50, %51 : vector<8x4xf32>
    %53 = arith.truncf %52 : vector<8x4xf32> to vector<8x4xbf16>
    %c0_25 = arith.constant 0 : index
    %c0_26 = arith.constant 0 : index
    %c0_27 = arith.constant 0 : index
    %54 = vector.load %arg10[%c0_25, %c0_26, %c0_27] : memref<1x8x32xbf16, #tpu.memory_space<vmem>>, vector<1x8x4xbf16>
    %55 = vector.shape_cast %54 : vector<1x8x4xbf16> to vector<8x4xbf16>
    %56 = vector.shape_cast %53 : vector<8x4xbf16> to vector<1x8x4xbf16>
    tpu.vector_store %arg10[%c0_25, %c0_26, %c0_27], %56 {strides = array<i32>} : memref<1x8x32xbf16, #tpu.memory_space<vmem>>, vector<1x8x4xbf16>,
    %57 = arith.mulf %35, %29 : vector<8x4xf32>
    %58 = arith.mulf %34, %31 : vector<8x4xf32>
    %59 = arith.addf %57, %58 : vector<8x4xf32>
    %60 = arith.truncf %59 : vector<8x4xf32> to vector<8x4xbf16>
    %c0_28 = arith.constant 0 : index
    %c0_29 = arith.constant 0 : index
    %c4_30 = arith.constant 4 : index
    %61 = vector.load %arg10[%c0_28, %c0_29, %c4_30] : memref<1x8x32xbf16, #tpu.memory_space<vmem>>, vector<1x8x4xbf16>
    %62 = vector.shape_cast %61 : vector<1x8x4xbf16> to vector<8x4xbf16>
    %63 = vector.shape_cast %60 : vector<8x4xbf16> to vector<1x8x4xbf16>
    tpu.vector_store %arg10[%c0_28, %c0_29, %c4_30], %63 {strides = array<i32>} : memref<1x8x32xbf16, #tpu.memory_space<vmem>>, vector<1x8x4xbf16>,
    %64 = vector.extract_strided_slice %19 {offsets = [0, 8], sizes = [8, 4], strides = [1, 1]} : vector<8x32xf32> to vector<8x4xf32>
    %65 = vector.extract_strided_slice %19 {offsets = [0, 12], sizes = [8, 4], strides = [1, 1]} : vector<8x32xf32> to vector<8x4xf32>
    %66 = vector.extract_strided_slice %21 {offsets = [0, 8], sizes = [8, 4], strides = [1, 1]} : vector<8x32xf32> to vector<8x4xf32>
    %67 = vector.extract_strided_slice %21 {offsets = [0, 12], sizes = [8, 4], strides = [1, 1]} : vector<8x32xf32> to vector<8x4xf32>
    %68 = arith.mulf %64, %29 : vector<8x4xf32>
    %69 = arith.mulf %65, %31 : vector<8x4xf32>
    %70 = arith.subf %68, %69 : vector<8x4xf32>
    %71 = arith.truncf %70 : vector<8x4xf32> to vector<8x4xbf16>
    %c0_31 = arith.constant 0 : index
    %c0_32 = arith.constant 0 : index
    %c8 = arith.constant 8 : index
    %72 = vector.load %arg9[%c0_31, %c0_32, %c8] : memref<1x8x32xbf16, #tpu.memory_space<vmem>>, vector<1x8x4xbf16>
    %73 = vector.shape_cast %72 : vector<1x8x4xbf16> to vector<8x4xbf16>
    %74 = vector.shape_cast %71 : vector<8x4xbf16> to vector<1x8x4xbf16>
    tpu.vector_store %arg9[%c0_31, %c0_32, %c8], %74 {strides = array<i32>} : memref<1x8x32xbf16, #tpu.memory_space<vmem>>, vector<1x8x4xbf16>,
    %75 = arith.mulf %65, %29 : vector<8x4xf32>
    %76 = arith.mulf %64, %31 : vector<8x4xf32>
    %77 = arith.addf %75, %76 : vector<8x4xf32>
    %78 = arith.truncf %77 : vector<8x4xf32> to vector<8x4xbf16>
    %c0_33 = arith.constant 0 : index
    %c0_34 = arith.constant 0 : index
    %c12 = arith.constant 12 : index
    %79 = vector.load %arg9[%c0_33, %c0_34, %c12] : memref<1x8x32xbf16, #tpu.memory_space<vmem>>, vector<1x8x4xbf16>
    %80 = vector.shape_cast %79 : vector<1x8x4xbf16> to vector<8x4xbf16>
    %81 = vector.shape_cast %78 : vector<8x4xbf16> to vector<1x8x4xbf16>
    tpu.vector_store %arg9[%c0_33, %c0_34, %c12], %81 {strides = array<i32>} : memref<1x8x32xbf16, #tpu.memory_space<vmem>>, vector<1x8x4xbf16>,
    %82 = arith.mulf %66, %29 : vector<8x4xf32>
    %83 = arith.mulf %67, %31 : vector<8x4xf32>
    %84 = arith.subf %82, %83 : vector<8x4xf32>
    %85 = arith.truncf %84 : vector<8x4xf32> to vector<8x4xbf16>
    %c0_35 = arith.constant 0 : index
    %c0_36 = arith.constant 0 : index
    %c8_37 = arith.constant 8 : index
    %86 = vector.load %arg10[%c0_35, %c0_36, %c8_37] : memref<1x8x32xbf16, #tpu.memory_space<vmem>>, vector<1x8x4xbf16>
    %87 = vector.shape_cast %86 : vector<1x8x4xbf16> to vector<8x4xbf16>
    %88 = vector.shape_cast %85 : vector<8x4xbf16> to vector<1x8x4xbf16>
    tpu.vector_store %arg10[%c0_35, %c0_36, %c8_37], %88 {strides = array<i32>} : memref<1x8x32xbf16, #tpu.memory_space<vmem>>, vector<1x8x4xbf16>,
    %89 = arith.mulf %67, %29 : vector<8x4xf32>
    %90 = arith.mulf %66, %31 : vector<8x4xf32>
    %91 = arith.addf %89, %90 : vector<8x4xf32>
    %92 = arith.truncf %91 : vector<8x4xf32> to vector<8x4xbf16>
    %c0_38 = arith.constant 0 : index
    %c0_39 = arith.constant 0 : index
    %c12_40 = arith.constant 12 : index
    %93 = vector.load %arg10[%c0_38, %c0_39, %c12_40] : memref<1x8x32xbf16, #tpu.memory_space<vmem>>, vector<1x8x4xbf16>
    %94 = vector.shape_cast %93 : vector<1x8x4xbf16> to vector<8x4xbf16>
    %95 = vector.shape_cast %92 : vector<8x4xbf16> to vector<1x8x4xbf16>
    tpu.vector_store %arg10[%c0_38, %c0_39, %c12_40], %95 {strides = array<i32>} : memref<1x8x32xbf16, #tpu.memory_space<vmem>>, vector<1x8x4xbf16>,
    %96 = vector.extract_strided_slice %19 {offsets = [0, 16], sizes = [8, 4], strides = [1, 1]} : vector<8x32xf32> to vector<8x4xf32>
    %97 = vector.extract_strided_slice %19 {offsets = [0, 20], sizes = [8, 4], strides = [1, 1]} : vector<8x32xf32> to vector<8x4xf32>
    %98 = vector.extract_strided_slice %21 {offsets = [0, 16], sizes = [8, 4], strides = [1, 1]} : vector<8x32xf32> to vector<8x4xf32>
    %99 = vector.extract_strided_slice %21 {offsets = [0, 20], sizes = [8, 4], strides = [1, 1]} : vector<8x32xf32> to vector<8x4xf32>
    %100 = arith.mulf %96, %29 : vector<8x4xf32>
    %101 = arith.mulf %97, %31 : vector<8x4xf32>
    %102 = arith.subf %100, %101 : vector<8x4xf32>
    %103 = arith.truncf %102 : vector<8x4xf32> to vector<8x4xbf16>
    %c0_41 = arith.constant 0 : index
    %c0_42 = arith.constant 0 : index
    %c16 = arith.constant 16 : index
    %104 = vector.load %arg9[%c0_41, %c0_42, %c16] : memref<1x8x32xbf16, #tpu.memory_space<vmem>>, vector<1x8x4xbf16>
    %105 = vector.shape_cast %104 : vector<1x8x4xbf16> to vector<8x4xbf16>
    %106 = vector.shape_cast %103 : vector<8x4xbf16> to vector<1x8x4xbf16>
    tpu.vector_store %arg9[%c0_41, %c0_42, %c16], %106 {strides = array<i32>} : memref<1x8x32xbf16, #tpu.memory_space<vmem>>, vector<1x8x4xbf16>,
    %107 = arith.mulf %97, %29 : vector<8x4xf32>
    %108 = arith.mulf %96, %31 : vector<8x4xf32>
    %109 = arith.addf %107, %108 : vector<8x4xf32>
    %110 = arith.truncf %109 : vector<8x4xf32> to vector<8x4xbf16>
    %c0_43 = arith.constant 0 : index
    %c0_44 = arith.constant 0 : index
    %c20 = arith.constant 20 : index
    %111 = vector.load %arg9[%c0_43, %c0_44, %c20] : memref<1x8x32xbf16, #tpu.memory_space<vmem>>, vector<1x8x4xbf16>
    %112 = vector.shape_cast %111 : vector<1x8x4xbf16> to vector<8x4xbf16>
    %113 = vector.shape_cast %110 : vector<8x4xbf16> to vector<1x8x4xbf16>
    tpu.vector_store %arg9[%c0_43, %c0_44, %c20], %113 {strides = array<i32>} : memref<1x8x32xbf16, #tpu.memory_space<vmem>>, vector<1x8x4xbf16>,
    %114 = arith.mulf %98, %29 : vector<8x4xf32>
    %115 = arith.mulf %99, %31 : vector<8x4xf32>
    %116 = arith.subf %114, %115 : vector<8x4xf32>
    %117 = arith.truncf %116 : vector<8x4xf32> to vector<8x4xbf16>
    %c0_45 = arith.constant 0 : index
    %c0_46 = arith.constant 0 : index
    %c16_47 = arith.constant 16 : index
    %118 = vector.load %arg10[%c0_45, %c0_46, %c16_47] : memref<1x8x32xbf16, #tpu.memory_space<vmem>>, vector<1x8x4xbf16>
    %119 = vector.shape_cast %118 : vector<1x8x4xbf16> to vector<8x4xbf16>
    %120 = vector.shape_cast %117 : vector<8x4xbf16> to vector<1x8x4xbf16>
    tpu.vector_store %arg10[%c0_45, %c0_46, %c16_47], %120 {strides = array<i32>} : memref<1x8x32xbf16, #tpu.memory_space<vmem>>, vector<1x8x4xbf16>,
    %121 = arith.mulf %99, %29 : vector<8x4xf32>
    %122 = arith.mulf %98, %31 : vector<8x4xf32>
    %123 = arith.addf %121, %122 : vector<8x4xf32>
    %124 = arith.truncf %123 : vector<8x4xf32> to vector<8x4xbf16>
    %c0_48 = arith.constant 0 : index
    %c0_49 = arith.constant 0 : index
    %c20_50 = arith.constant 20 : index
    %125 = vector.load %arg10[%c0_48, %c0_49, %c20_50] : memref<1x8x32xbf16, #tpu.memory_space<vmem>>, vector<1x8x4xbf16>
    %126 = vector.shape_cast %125 : vector<1x8x4xbf16> to vector<8x4xbf16>
    %127 = vector.shape_cast %124 : vector<8x4xbf16> to vector<1x8x4xbf16>
    tpu.vector_store %arg10[%c0_48, %c0_49, %c20_50], %127 {strides = array<i32>} : memref<1x8x32xbf16, #tpu.memory_space<vmem>>, vector<1x8x4xbf16>,
    %128 = vector.extract_strided_slice %19 {offsets = [0, 24], sizes = [8, 4], strides = [1, 1]} : vector<8x32xf32> to vector<8x4xf32>
    %129 = vector.extract_strided_slice %19 {offsets = [0, 28], sizes = [8, 4], strides = [1, 1]} : vector<8x32xf32> to vector<8x4xf32>
    %130 = vector.extract_strided_slice %21 {offsets = [0, 24], sizes = [8, 4], strides = [1, 1]} : vector<8x32xf32> to vector<8x4xf32>
    %131 = vector.extract_strided_slice %21 {offsets = [0, 28], sizes = [8, 4], strides = [1, 1]} : vector<8x32xf32> to vector<8x4xf32>
    %132 = arith.mulf %128, %29 : vector<8x4xf32>
    %133 = arith.mulf %129, %31 : vector<8x4xf32>
    %134 = arith.subf %132, %133 : vector<8x4xf32>
    %135 = arith.truncf %134 : vector<8x4xf32> to vector<8x4xbf16>
    %c0_51 = arith.constant 0 : index
    %c0_52 = arith.constant 0 : index
    %c24 = arith.constant 24 : index
    %136 = vector.load %arg9[%c0_51, %c0_52, %c24] : memref<1x8x32xbf16, #tpu.memory_space<vmem>>, vector<1x8x4xbf16>
    %137 = vector.shape_cast %136 : vector<1x8x4xbf16> to vector<8x4xbf16>
    %138 = vector.shape_cast %135 : vector<8x4xbf16> to vector<1x8x4xbf16>
    tpu.vector_store %arg9[%c0_51, %c0_52, %c24], %138 {strides = array<i32>} : memref<1x8x32xbf16, #tpu.memory_space<vmem>>, vector<1x8x4xbf16>,
    %139 = arith.mulf %129, %29 : vector<8x4xf32>
    %140 = arith.mulf %128, %31 : vector<8x4xf32>
    %141 = arith.addf %139, %140 : vector<8x4xf32>
    %142 = arith.truncf %141 : vector<8x4xf32> to vector<8x4xbf16>
    %c0_53 = arith.constant 0 : index
    %c0_54 = arith.constant 0 : index
    %c28 = arith.constant 28 : index
    %143 = vector.load %arg9[%c0_53, %c0_54, %c28] : memref<1x8x32xbf16, #tpu.memory_space<vmem>>, vector<1x8x4xbf16>
    %144 = vector.shape_cast %143 : vector<1x8x4xbf16> to vector<8x4xbf16>
    %145 = vector.shape_cast %142 : vector<8x4xbf16> to vector<1x8x4xbf16>
    tpu.vector_store %arg9[%c0_53, %c0_54, %c28], %145 {strides = array<i32>} : memref<1x8x32xbf16, #tpu.memory_space<vmem>>, vector<1x8x4xbf16>,
    %146 = arith.mulf %130, %29 : vector<8x4xf32>
    %147 = arith.mulf %131, %31 : vector<8x4xf32>
    %148 = arith.subf %146, %147 : vector<8x4xf32>
    %149 = arith.truncf %148 : vector<8x4xf32> to vector<8x4xbf16>
    %c0_55 = arith.constant 0 : index
    %c0_56 = arith.constant 0 : index
    %c24_57 = arith.constant 24 : index
    %150 = vector.load %arg10[%c0_55, %c0_56, %c24_57] : memref<1x8x32xbf16, #tpu.memory_space<vmem>>, vector<1x8x4xbf16>
    %151 = vector.shape_cast %150 : vector<1x8x4xbf16> to vector<8x4xbf16>
    %152 = vector.shape_cast %149 : vector<8x4xbf16> to vector<1x8x4xbf16>
    tpu.vector_store %arg10[%c0_55, %c0_56, %c24_57], %152 {strides = array<i32>} : memref<1x8x32xbf16, #tpu.memory_space<vmem>>, vector<1x8x4xbf16>,
    %153 = arith.mulf %131, %29 : vector<8x4xf32>
    %154 = arith.mulf %130, %31 : vector<8x4xf32>
    %155 = arith.addf %153, %154 : vector<8x4xf32>
    %156 = arith.truncf %155 : vector<8x4xf32> to vector<8x4xbf16>
    %c0_58 = arith.constant 0 : index
    %c0_59 = arith.constant 0 : index
    %c28_60 = arith.constant 28 : index
    %157 = vector.load %arg10[%c0_58, %c0_59, %c28_60] : memref<1x8x32xbf16, #tpu.memory_space<vmem>>, vector<1x8x4xbf16>
    %158 = vector.shape_cast %157 : vector<1x8x4xbf16> to vector<8x4xbf16>
    %159 = vector.shape_cast %156 : vector<8x4xbf16> to vector<1x8x4xbf16>
    tpu.vector_store %arg10[%c0_58, %c0_59, %c28_60], %159 {strides = array<i32>} : memref<1x8x32xbf16, #tpu.memory_space<vmem>>, vector<1x8x4xbf16>,
    return
  }
  func.func @transform_0(%arg0: i32, %arg1: i32) -> (i32, i32, i32) {
    %c0_i32 = arith.constant 0 : i32
    %c0_i32_0 = arith.constant 0 : i32
    return %arg0, %arg1, %c0_i32 : i32, i32, i32
  }
  func.func @transform_1(%arg0: i32, %arg1: i32) -> (i32, i32) {
    %c0_i32 = arith.constant 0 : i32
    %c0_i32_0 = arith.constant 0 : i32
    %c0_i32_1 = arith.constant 0 : i32
    return %c0_i32, %c0_i32_0 : i32, i32
  }
  func.func @transform_2(%arg0: i32, %arg1: i32) -> (i32, i32) {
    %c0_i32 = arith.constant 0 : i32
    %c0_i32_0 = arith.constant 0 : i32
    %c0_i32_1 = arith.constant 0 : i32
    return %c0_i32, %c0_i32_0 : i32, i32
  }
  func.func @transform_3(%arg0: i32, %arg1: i32) -> (i32, i32) {
    %c0_i32 = arith.constant 0 : i32
    %c0_i32_0 = arith.constant 0 : i32
    %c0_i32_1 = arith.constant 0 : i32
    return %c0_i32, %c0_i32_0 : i32, i32
  }
  func.func @transform_4(%arg0: i32, %arg1: i32) -> (i32, i32) {
    %c0_i32 = arith.constant 0 : i32
    %c0_i32_0 = arith.constant 0 : i32
    %c0_i32_1 = arith.constant 0 : i32
    return %c0_i32, %c0_i32_0 : i32, i32
  }
  func.func @transform_5(%arg0: i32, %arg1: i32) -> (i32, i32) {
    %c0_i32 = arith.constant 0 : i32
    %c0_i32_0 = arith.constant 0 : i32
    %c0_i32_1 = arith.constant 0 : i32
    return %c0_i32, %c0_i32_0 : i32, i32
  }
  func.func @transform_6(%arg0: i32, %arg1: i32) -> (i32, i32) {
    %c0_i32 = arith.constant 0 : i32
    %c0_i32_0 = arith.constant 0 : i32
    %c0_i32_1 = arith.constant 0 : i32
    return %c0_i32, %c0_i32_0 : i32, i32
  }
  func.func @transform_7(%arg0: i32, %arg1: i32) -> (i32, i32, i32) {
    %c0_i32 = arith.constant 0 : i32
    %c0_i32_0 = arith.constant 0 : i32
    return %arg0, %arg1, %c0_i32 : i32, i32, i32
  }
  func.func @transform_8(%arg0: i32, %arg1: i32) -> (i32, i32, i32) {
    %c0_i32 = arith.constant 0 : i32
    %c0_i32_0 = arith.constant 0 : i32
    return %arg0, %arg1, %c0_i32 : i32, i32, i32
  }
  func.func @transform_9(%arg0: i32, %arg1: i32) -> (i32, i32, i32) {
    %c0_i32 = arith.constant 0 : i32
    %c0_i32_0 = arith.constant 0 : i32
    return %arg0, %arg1, %c0_i32 : i32, i32, i32
  }
}

</mosaic_0001>

<llo_original>
// kernel: tpu_custom_call.1
$region0: #{tpu_custom_call.1}
  #allocation0 [shape = 'u32[]', space=smem, size = 0x4, offset = 0x4, fixed_abs, tag = 'smem constant byte address 0x4 - core index']
  #allocation1 [shape = 'u32[144,128]{1,0:T(1,128)}', space=vmem, size = 0x12000, scoped, tag = 'internal scratch']
  %s0 = inlined_call_operand.vmem [shape: f32[2,8,32], index: 0, kind: input, shape index: {}]
  %s1 = inlined_call_operand.vmem [shape: f32[1,32], index: 1, kind: input, shape index: {}]
  %s2 = inlined_call_operand.hbm [shape: bf16[32,32], index: 2, kind: input, shape index: {}]
  %s3 = inlined_call_operand.vmem [shape: bf16[32,32], index: 3, kind: input, shape index: {}]
  %s4 = inlined_call_operand.hbm [shape: bf16[32,32], index: 4, kind: input, shape index: {}]
  %s5 = inlined_call_operand.vmem [shape: f32[8,4], index: 5, kind: input, shape index: {}]
  %s6 = inlined_call_operand.vmem [shape: f32[8,4], index: 6, kind: input, shape index: {}]
  %s7 = inlined_call_operand.hbm [shape: bf16[2,8,32], index: 7, kind: output, shape index: {0}]
  %s8 = inlined_call_operand.hbm [shape: bf16[2,8,32], index: 8, kind: output, shape index: {1}]
  %s9 = inlined_call_operand.hbm [shape: bf16[2,8,32], index: 9, kind: output, shape index: {2}]
  %10 = xla_tuple %s7, %s8, %s9
  %s11 = sld [smem:[#allocation0]]
  $region85: #{tpu_custom_call.1} parent=0
    _
  %s13 = ssub.s32 1, %s11
  %s14 = scalar_select 0, %s13, %s11
  $region1: #{tpu_custom_call.1} parent=0
    #allocation2 [shape = 'u8[8192]{0}', space=vmem, size = 0x2000, scoped, tag = 'input window, operand 2, single buffered']
    #allocation3 [shape = 's32[2]{0}', space=sflag, size = 0x8, scoped, tag = 'scoped memory for tpu_custom_call.1']
    #allocation4 [shape = 's32[2]{0}', space=sflag, size = 0x8, scoped, tag = 'scoped memory for tpu_custom_call.1']
    #allocation5 [shape = 'u8[8192]{0}', space=vmem, size = 0x2000, scoped, tag = 'input window, operand 4, single buffered']
    #allocation6 [shape = 's32[1]{0}', space=sflag, size = 0x4, scoped, tag = 'scoped memory for tpu_custom_call.1']
    #allocation7 [shape = 'u8[4096]{0}', space=vmem, size = 0x1000, scoped, tag = 'output window, operand 0']
    #allocation8 [shape = 'u8[4096]{0}', space=vmem, size = 0x1000, scoped, tag = 'output window, operand 1']
    #allocation9 [shape = 's32[2]{0}', space=sflag, size = 0x8, scoped, tag = 'scoped memory for tpu_custom_call.1']
    #allocation10 [shape = 'u8[4096]{0}', space=vmem, size = 0x1000, scoped, tag = 'output window, operand 2']
    %15 = vsyncpa [#allocation3], 0
    %16 = vsyncpa [#allocation6], 0
    %17 = vsyncpa [#allocation4], 0
    %s18 = scalar_lea.sflag [#allocation4], 1
    %19 = vsyncpa %s18, 0
    %20 = vsyncpa [#allocation9], 0
    %s21 = scalar_lea.sflag [#allocation9], 1
    %22 = vsyncpa %s21, 0
    loop: start=0, step=1, limit=4
    $region2: #{tpu_custom_call.1} parent=1 // loop_pre_header
      _
    $region3: #{tpu_custom_call.1} parent=1 // loop_header
      %s24 = sphi 0, %s28
      %p25 = scmp.ge.s32.totalorder %s24, 4
      %s31 = sphi 0, %s43
      %s32 = sphi 0, %s39
      %s33 = sphi 0, %s31
      %s34 = sphi 0, %s32
      %s35 = sphi 0, %s33
      %s36 = sphi 0, %s34
      %s48 = sphi 0, %s50
      %s51 = sphi 0, %s48
      %s52 = sphi 0, %s51
      %s68 = sphi 0, %s52
      %s72 = sphi 0, %s72
      %s74 = sphi 0, %s72
      %s75 = sphi 0, %s74
      %s89 = sphi 0, %s75
      %s93 = sphi 0, %s93
      %s95 = sphi 0, %s93
      %s96 = sphi 0, %s95
      %s110 = sphi 0, %s96
      %s114 = sphi 0, %s114
      %s116 = sphi 0, %s114
      %s117 = sphi 0, %s116
      %s131 = sphi 0, %s117
      %s135 = sphi 0, %s135
      %s137 = sphi 0, %s135
      %s138 = sphi 0, %s137
      %s152 = sphi 0, %s138
      %s156 = sphi 0, %s156
      %s158 = sphi 0, %s156
      %s159 = sphi 0, %s158
      %s173 = sphi 0, %s159
      %s177 = sphi 0, %s177
      %s179 = sphi 0, %s177
      %s180 = sphi 0, %s179
      %s194 = sphi 0, %s180
      %s202 = sphi 0, %s204
      %s205 = sphi 0, %s202
      %s206 = sphi 0, %s205
      %s222 = sphi 0, %s206
      %s230 = sphi 0, %s232
      %s233 = sphi 0, %s230
      %s234 = sphi 0, %s233
      %s250 = sphi 0, %s234
      %s258 = sphi 0, %s260
      %s261 = sphi 0, %s258
      %s262 = sphi 0, %s261
      %s278 = sphi 0, %s262
    $region4: #{tpu_custom_call.1} parent=1 // loop_header_branch
      %27 = sbr.rel (%p25) target = $region8
    $region5: #{tpu_custom_call.1} parent=1 // loop_body
      %s29 = ssub.s32 %s24, 1
      %s30 = ssub.s32 %s24, 2
      %s37 = sadd.s32 1, %s32
      %p38 = scmp.ge.s32.totalorder %s37, 1
      %s39 = scalar_select %p38, 0, %s37
      %s40 = sadd.s32 1, %s31
      %s41 = scalar_select %p38, %s40, %s31
      %p42 = scmp.ge.s32.totalorder %s41, 2
      %s43 = scalar_select %p42, 0, %s41
      %s44 = ssub.s32 %s31, %s43
      %s45 = ssub.s32 %s32, %s39
      %s46 = sor.u32 %s44, %s45
      %p47 = scmp.eq.s32.totalorder %s46, 0
      %s49 = sadd.s32 %s48, 1
      %s50 = scalar_select %p47, %s48, %s49
      %p53 = pneg %p47
      %p54 = scmp.eq.s32.totalorder %s24, 1
      %p55 = por %p53, %p54
      %p56 = scmp.ne.s32.totalorder %s48, %s51
      %p57 = scmp.eq.s32.totalorder %s24, 0
      %p58 = por %p56, %p57
      %p59 = scmp.ne.s32.totalorder %s48, %s51
      %p60 = scmp.eq.s32.totalorder %s29, 1
      %p61 = por %p59, %p60
      %p62 = scmp.ne.s32.totalorder %s51, %s52
      %p63 = scmp.eq.s32.totalorder %s29, 0
      %p64 = por %p62, %p63
      %p65 = scmp.ne.s32.totalorder %s51, %s52
      %p66 = scmp.eq.s32.totalorder %s30, 1
      %p67 = por %p65, %p66
      %p69 = scmp.ne.s32.totalorder %s52, %s68
      %p70 = scmp.eq.s32.totalorder %s30, 0
      %p71 = por %p69, %p70
      %s73 = sadd.s32 %s72, 1
      %p76 = scmp.eq.s32.totalorder %s24, 1
      %p77 = scmp.ne.s32.totalorder %s72, %s74
      %p78 = scmp.eq.s32.totalorder %s24, 0
      %p79 = por %p77, %p78
      %p80 = scmp.ne.s32.totalorder %s72, %s74
      %p81 = scmp.eq.s32.totalorder %s29, 1
      %p82 = por %p80, %p81
      %p83 = scmp.ne.s32.totalorder %s74, %s75
      %p84 = scmp.eq.s32.totalorder %s29, 0
      %p85 = por %p83, %p84
      %p86 = scmp.ne.s32.totalorder %s74, %s75
      %p87 = scmp.eq.s32.totalorder %s30, 1
      %p88 = por %p86, %p87
      %p90 = scmp.ne.s32.totalorder %s75, %s89
      %p91 = scmp.eq.s32.totalorder %s30, 0
      %p92 = por %p90, %p91
      %s94 = sadd.s32 %s93, 1
      %p97 = scmp.eq.s32.totalorder %s24, 1
      %p98 = scmp.ne.s32.totalorder %s93, %s95
      %p99 = scmp.eq.s32.totalorder %s24, 0
      %p100 = por %p98, %p99
      %p101 = scmp.ne.s32.totalorder %s93, %s95
      %p102 = scmp.eq.s32.totalorder %s29, 1
      %p103 = por %p101, %p102
      %p104 = scmp.ne.s32.totalorder %s95, %s96
      %p105 = scmp.eq.s32.totalorder %s29, 0
      %p106 = por %p104, %p105
      %p107 = scmp.ne.s32.totalorder %s95, %s96
      %p108 = scmp.eq.s32.totalorder %s30, 1
      %p109 = por %p107, %p108
      %p111 = scmp.ne.s32.totalorder %s96, %s110
      %p112 = scmp.eq.s32.totalorder %s30, 0
      %p113 = por %p111, %p112
      %s115 = sadd.s32 %s114, 1
      %p118 = scmp.eq.s32.totalorder %s24, 1
      %p119 = scmp.ne.s32.totalorder %s114, %s116
      %p120 = scmp.eq.s32.totalorder %s24, 0
      %p121 = por %p119, %p120
      %p122 = scmp.ne.s32.totalorder %s114, %s116
      %p123 = scmp.eq.s32.totalorder %s29, 1
      %p124 = por %p122, %p123
      %p125 = scmp.ne.s32.totalorder %s116, %s117
      %p126 = scmp.eq.s32.totalorder %s29, 0
      %p127 = por %p125, %p126
      %p128 = scmp.ne.s32.totalorder %s116, %s117
      %p129 = scmp.eq.s32.totalorder %s30, 1
      %p130 = por %p128, %p129
      %p132 = scmp.ne.s32.totalorder %s117, %s131
      %p133 = scmp.eq.s32.totalorder %s30, 0
      %p134 = por %p132, %p133
      %s136 = sadd.s32 %s135, 1
      %p139 = scmp.eq.s32.totalorder %s24, 1
      %p140 = scmp.ne.s32.totalorder %s135, %s137
      %p141 = scmp.eq.s32.totalorder %s24, 0
      %p142 = por %p140, %p141
      %p143 = scmp.ne.s32.totalorder %s135, %s137
      %p144 = scmp.eq.s32.totalorder %s29, 1
      %p145 = por %p143, %p144
      %p146 = scmp.ne.s32.totalorder %s137, %s138
      %p147 = scmp.eq.s32.totalorder %s29, 0
      %p148 = por %p146, %p147
      %p149 = scmp.ne.s32.totalorder %s137, %s138
      %p150 = scmp.eq.s32.totalorder %s30, 1
      %p151 = por %p149, %p150
      %p153 = scmp.ne.s32.totalorder %s138, %s152
      %p154 = scmp.eq.s32.totalorder %s30, 0
      %p155 = por %p153, %p154
      %s157 = sadd.s32 %s156, 1
      %p160 = scmp.eq.s32.totalorder %s24, 1
      %p161 = scmp.ne.s32.totalorder %s156, %s158
      %p162 = scmp.eq.s32.totalorder %s24, 0
      %p163 = por %p161, %p162
      %p164 = scmp.ne.s32.totalorder %s156, %s158
      %p165 = scmp.eq.s32.totalorder %s29, 1
      %p166 = por %p164, %p165
      %p167 = scmp.ne.s32.totalorder %s158, %s159
      %p168 = scmp.eq.s32.totalorder %s29, 0
      %p169 = por %p167, %p168
      %p170 = scmp.ne.s32.totalorder %s158, %s159
      %p171 = scmp.eq.s32.totalorder %s30, 1
      %p172 = por %p170, %p171
      %p174 = scmp.ne.s32.totalorder %s159, %s173
      %p175 = scmp.eq.s32.totalorder %s30, 0
      %p176 = por %p174, %p175
      %s178 = sadd.s32 %s177, 1
      %p181 = scmp.eq.s32.totalorder %s24, 1
      %p182 = scmp.ne.s32.totalorder %s177, %s179
      %p183 = scmp.eq.s32.totalorder %s24, 0
      %p184 = por %p182, %p183
      %p185 = scmp.ne.s32.totalorder %s177, %s179
      %p186 = scmp.eq.s32.totalorder %s29, 1
      %p187 = por %p185, %p186
      %p188 = scmp.ne.s32.totalorder %s179, %s180
      %p189 = scmp.eq.s32.totalorder %s29, 0
      %p190 = por %p188, %p189
      %p191 = scmp.ne.s32.totalorder %s179, %s180
      %p192 = scmp.eq.s32.totalorder %s30, 1
      %p193 = por %p191, %p192
      %p195 = scmp.ne.s32.totalorder %s180, %s194
      %p196 = scmp.eq.s32.totalorder %s30, 0
      %p197 = por %p195, %p196
      %s198 = ssub.s32 %s31, %s43
      %s199 = ssub.s32 %s32, %s39
      %s200 = sor.u32 %s198, %s199
      %p201 = scmp.eq.s32.totalorder %s200, 0
      %s203 = sadd.s32 %s202, 1
      %s204 = scalar_select %p201, %s202, %s203
      %p207 = pneg %p201
      %p208 = scmp.eq.s32.totalorder %s24, 1
      %p209 = por %p207, %p208
      %p210 = scmp.ne.s32.totalorder %s202, %s205
      %p211 = scmp.eq.s32.totalorder %s24, 0
      %p212 = por %p210, %p211
      %p213 = scmp.ne.s32.totalorder %s202, %s205
      %p214 = scmp.eq.s32.totalorder %s29, 1
      %p215 = por %p213, %p214
      %p216 = scmp.ne.s32.totalorder %s205, %s206
      %p217 = scmp.eq.s32.totalorder %s29, 0
      %p218 = por %p216, %p217
      %p219 = scmp.ne.s32.totalorder %s205, %s206
      %p220 = scmp.eq.s32.totalorder %s30, 1
      %p221 = por %p219, %p220
      %p223 = scmp.ne.s32.totalorder %s206, %s222
      %p224 = scmp.eq.s32.totalorder %s30, 0
      %p225 = por %p223, %p224
      %s226 = ssub.s32 %s31, %s43
      %s227 = ssub.s32 %s32, %s39
      %s228 = sor.u32 %s226, %s227
      %p229 = scmp.eq.s32.totalorder %s228, 0
      %s231 = sadd.s32 %s230, 1
      %s232 = scalar_select %p229, %s230, %s231
      %p235 = pneg %p229
      %p236 = scmp.eq.s32.totalorder %s24, 1
      %p237 = por %p235, %p236
      %p238 = scmp.ne.s32.totalorder %s230, %s233
      %p239 = scmp.eq.s32.totalorder %s24, 0
      %p240 = por %p238, %p239
      %p241 = scmp.ne.s32.totalorder %s230, %s233
      %p242 = scmp.eq.s32.totalorder %s29, 1
      %p243 = por %p241, %p242
      %p244 = scmp.ne.s32.totalorder %s233, %s234
      %p245 = scmp.eq.s32.totalorder %s29, 0
      %p246 = por %p244, %p245
      %p247 = scmp.ne.s32.totalorder %s233, %s234
      %p248 = scmp.eq.s32.totalorder %s30, 1
      %p249 = por %p247, %p248
      %p251 = scmp.ne.s32.totalorder %s234, %s250
      %p252 = scmp.eq.s32.totalorder %s30, 0
      %p253 = por %p251, %p252
      %s254 = ssub.s32 %s31, %s43
      %s255 = ssub.s32 %s32, %s39
      %s256 = sor.u32 %s254, %s255
      %p257 = scmp.eq.s32.totalorder %s256, 0
      %s259 = sadd.s32 %s258, 1
      %s260 = scalar_select %p257, %s258, %s259
      %p263 = pneg %p257
      %p264 = scmp.eq.s32.totalorder %s24, 1
      %p265 = por %p263, %p264
      %p266 = scmp.ne.s32.totalorder %s258, %s261
      %p267 = scmp.eq.s32.totalorder %s24, 0
      %p268 = por %p266, %p267
      %p269 = scmp.ne.s32.totalorder %s258, %s261
      %p270 = scmp.eq.s32.totalorder %s29, 1
      %p271 = por %p269, %p270
      %p272 = scmp.ne.s32.totalorder %s261, %s262
      %p273 = scmp.eq.s32.totalorder %s29, 0
      %p274 = por %p272, %p273
      %p275 = scmp.ne.s32.totalorder %s261, %s262
      %p276 = scmp.eq.s32.totalorder %s30, 1
      %p277 = por %p275, %p276
      %p279 = scmp.ne.s32.totalorder %s262, %s278
      %p280 = scmp.eq.s32.totalorder %s30, 0
      %p281 = por %p279, %p280
      %p282 = scmp.le.s32.totalorder 1, %s24
      %p283 = scmp.lt.s32.totalorder %s24, 3
      %p284 = pnand %p282, %p283
      %p285 = pneg %p284
      // Predicated region
      $region9: #{tpu_custom_call.1} parent=5 // pred_check
        _
      $region10: #{tpu_custom_call.1} parent=5 // pred_check_branch
        %287 = sbr.rel (%p284) target = $region12
      $region11: #{tpu_custom_call.1} parent=5 // pred_region
        %s288 = ssub.s32 %s24, 1
        // Predicated region
        $region13: #{tpu_custom_call.1} parent=11 // pred_check
          %p289 = pneg %p85
        $region14: #{tpu_custom_call.1} parent=11 // pred_check_branch
          %291 = sbr.rel (%p289) target = $region16
        $region15: #{tpu_custom_call.1} parent=11 // pred_region
          _
        $region16: #{tpu_custom_call.1} parent=11 // pred_fallthru
          _
        // Predicated region
        $region17: #{tpu_custom_call.1} parent=11 // pred_check
          %p292 = pneg %p106
        $region18: #{tpu_custom_call.1} parent=11 // pred_check_branch
          %294 = sbr.rel (%p292) target = $region20
        $region19: #{tpu_custom_call.1} parent=11 // pred_region
          %s296 = ssub.s32 256, 256
          %297 = vsyncadd [#allocation3], %s296
          %s298 = sshll.u32 [#allocation2], 4
          %s299 = int_to_ptr.vmem [resolvable:$true] %s298
          %304 = dma.hbm_to_vmem [thread:$0]  %s2, 256, %s299, [#allocation3], 64, 64, 4
        $region20: #{tpu_custom_call.1} parent=11 // pred_fallthru
          _
        // Predicated region
        $region21: #{tpu_custom_call.1} parent=11 // pred_check
          %p305 = pneg %p127
        $region22: #{tpu_custom_call.1} parent=11 // pred_check_branch
          %307 = sbr.rel (%p305) target = $region24
        $region23: #{tpu_custom_call.1} parent=11 // pred_region
          _
        $region24: #{tpu_custom_call.1} parent=11 // pred_fallthru
          _
        // Predicated region
        $region25: #{tpu_custom_call.1} parent=11 // pred_check
          %p308 = pneg %p148
        $region26: #{tpu_custom_call.1} parent=11 // pred_check_branch
          %310 = sbr.rel (%p308) target = $region28
        $region27: #{tpu_custom_call.1} parent=11 // pred_region
          %s312 = ssub.s32 256, 256
          %313 = vsyncadd [#allocation6], %s312
          %s314 = sshll.u32 [#allocation5], 4
          %s315 = int_to_ptr.vmem [resolvable:$true] %s314
          %320 = dma.hbm_to_vmem [thread:$0]  %s4, 256, %s315, [#allocation6], 64, 64, 4
        $region28: #{tpu_custom_call.1} parent=11 // pred_fallthru
          _
        // Predicated region
        $region29: #{tpu_custom_call.1} parent=11 // pred_check
          %p321 = pneg %p169
        $region30: #{tpu_custom_call.1} parent=11 // pred_check_branch
          %323 = sbr.rel (%p321) target = $region32
        $region31: #{tpu_custom_call.1} parent=11 // pred_region
          _
        $region32: #{tpu_custom_call.1} parent=11 // pred_fallthru
          _
        // Predicated region
        $region33: #{tpu_custom_call.1} parent=11 // pred_check
          %p324 = pneg %p190
        $region34: #{tpu_custom_call.1} parent=11 // pred_check_branch
          %326 = sbr.rel (%p324) target = $region36
        $region35: #{tpu_custom_call.1} parent=11 // pred_region
          _
        $region36: #{tpu_custom_call.1} parent=11 // pred_fallthru
          _
      $region12: #{tpu_custom_call.1} parent=5 // pred_fallthru
        _
      %p327 = scmp.lt.s32.totalorder %s24, 2
      // Predicated region
      $region37: #{tpu_custom_call.1} parent=5 // pred_check
        %p328 = pneg %p327
      $region38: #{tpu_custom_call.1} parent=5 // pred_check_branch
        %330 = sbr.rel (%p328) target = $region40
      $region39: #{tpu_custom_call.1} parent=5 // pred_region
        // Predicated region
        $region41: #{tpu_custom_call.1} parent=39 // pred_check
          %p331 = pneg %p58
        $region42: #{tpu_custom_call.1} parent=39 // pred_check_branch
          %333 = sbr.rel (%p331) target = $region44
        $region43: #{tpu_custom_call.1} parent=39 // pred_region
          %p334 = scmp.lt.s32.totalorder %s31, 1
          %s335 = scalar_select %p334, %s31, 1
          %p336 = scmp.lt.s32.totalorder %s32, 0
          %s337 = scalar_select %p336, %s32, 0
          %s338 = sadd.s32 %s337, %s335
          %s339 = smul.addr %s338, 8
          %s340 = scalar_lea.vmem %s0, %s339
        $region44: #{tpu_custom_call.1} parent=39 // pred_fallthru
          _
      $region40: #{tpu_custom_call.1} parent=5 // pred_fallthru
        _
      %p341 = scmp.le.s32.totalorder 1, %s24
      %p342 = scmp.lt.s32.totalorder %s24, 3
      %p343 = pnand %p341, %p342
      %p344 = pneg %p343
      // Predicated region
      $region45: #{tpu_custom_call.1} parent=5 // pred_check
        _
      $region46: #{tpu_custom_call.1} parent=5 // pred_check_branch
        %346 = sbr.rel (%p343) target = $region48
      $region47: #{tpu_custom_call.1} parent=5 // pred_region
        %s347 = ssub.s32 %s24, 1
        // Predicated region
        $region49: #{tpu_custom_call.1} parent=47 // pred_check
          %p348 = pneg %p106
        $region50: #{tpu_custom_call.1} parent=47 // pred_check_branch
          %350 = sbr.rel (%p348) target = $region52
        $region51: #{tpu_custom_call.1} parent=47 // pred_region
          %351 = dma.done [#allocation3], 256
        $region52: #{tpu_custom_call.1} parent=47 // pred_fallthru
          _
        // Predicated region
        $region53: #{tpu_custom_call.1} parent=47 // pred_check
          %p352 = pneg %p148
        $region54: #{tpu_custom_call.1} parent=47 // pred_check_branch
          %354 = sbr.rel (%p352) target = $region56
        $region55: #{tpu_custom_call.1} parent=47 // pred_region
          %355 = dma.done [#allocation6], 256
        $region56: #{tpu_custom_call.1} parent=47 // pred_fallthru
          _
        %p356 = scmp.lt.s32.totalorder %s33, 1
        %s357 = scalar_select %p356, %s33, 1
        %p358 = scmp.lt.s32.totalorder %s34, 0
        %s359 = scalar_select %p358, %s34, 0
        %s360 = sadd.s32 %s359, %s357
        %s361 = smul.addr %s360, 8
        %s362 = scalar_lea.vmem %s0, %s361
        %p363 = pneg %p64
        %p364 = pneg %p61
        %p365 = pneg %p85
        %p366 = pneg %p82
        %p367 = pneg %p106
        %p368 = pneg %p103
        %p369 = pneg %p127
        %p370 = pneg %p124
        %p371 = pneg %p148
        %p372 = pneg %p145
        %p373 = pneg %p169
        %p374 = pneg %p166
        %p375 = pneg %p190
        %p376 = pneg %p187
        %p377 = pneg %p218
        %p378 = pneg %p215
        %s379 = sand.u32 %s205, 1
        %s380 = scalar_lea.sflag [#allocation4], %s379
        %s381 = sand.u32 %s205, 1
        %s382 = smul.addr %s381, 4
        %s383 = scalar_lea.vmem [#allocation7], %s382
        %p384 = pneg %p246
        %p385 = pneg %p243
        %s386 = sand.u32 %s29, 1
        %s387 = scalar_lea.sflag [#allocation9], %s386
        %s388 = sand.u32 %s233, 1
        %s389 = smul.addr %s388, 4
        %s390 = scalar_lea.vmem [#allocation8], %s389
        %p391 = pneg %p274
        %p392 = pneg %p271
        %s393 = sand.u32 %s29, 1
        %s394 = scalar_lea.sflag [#allocation9], %s393
        %s395 = sand.u32 %s261, 1
        %s396 = smul.addr %s395, 4
        %s397 = scalar_lea.vmem [#allocation10], %s396
        %p398 = scmp.lt.s32.totalorder %s33, 1
        %s399 = scalar_select %p398, %s33, 1
        %p400 = scmp.lt.s32.totalorder %s34, 0
        %s401 = scalar_select %p400, %s34, 0
        %s402 = sadd.s32 %s401, %s399
        %s403 = smul.addr %s402, 8
        %s404 = scalar_lea.vmem %s0, %s403
        %s406 = smul.u32 %s34, 8
        %v407 = vld [vmem:[%s404] sm:$0xff]
        %v408 = vmul.f32 %v407, %v407
        %vm409 = vcmask 261120
        %v410 = vsel %vm409, %v408, 0.0
        %411 = vadd.xlane.f32.xlu0 %v410
        %v412 = vpop.xlane.xlu0 %411
        %v413 = vrcp.pop 32.0
        %v414 = vmul.f32 %v412, %v413
        %v415 = vadd.f32 %v414, 1e-05
        %v416 = vrsqrt.pop %v415
        %v417 = vmul.f32 %v407, %v416
        %v418 = vld [vmem:[%s1] sm:$0x1]
        %v420 = vlaneseq
        %v421 = vshrl.u32 %v420, 7
        %v422 = vsub.s32 0, %v421
        %v423 = vrot.slane %v418, %v422
        %v425 = vmul.f32 %v417, %v423
        %v426 = vpack.c.bf16 %v425, %v425
        %v427 = vld [vmem:[#allocation2] sm:$0xf]
        %v428 = vld [vmem:[#allocation2 + $0x4] sm:$0xf]
        %v429 = vld [vmem:[#allocation2 + $0x8] sm:$0xf]
        %v430 = vld [vmem:[#allocation2 + $0xc] sm:$0xf]
        %v435 = vunpack.c.l.b16 %v427
        %v436 = vunpack.c.l.b16 %v428
        %v437 = vunpack.c.l.b16 %v429
        %v438 = vunpack.c.l.b16 %v430
        %v439 = vpack.c.b16 %v436, %v435
        %v440 = vpack.c.b16 %v438, %v437
        %v444 = vsel %vm409, %v426, 0
        %446 = vmatprep.subr.bf16.mxu0 0
        %447 = vmatpush1.bf16.msra.mxu0 %v439
        %448 = vmatprep.subr.bf16.mxu0 0
        %449 = vmatpush1.bf16.msra.mxu0 %v440
        %450 = vmatprep.subr.bf16.mxu0 0
        %451 = vmatpush1.bf16.msra.mxu0 0
        %452 = vmatprep.subr.bf16.mxu0 0
        %453 = vmatpush1.bf16.msra.mxu0 0
        %454 = vmatprep.subr.bf16.mxu0 0
        %455 = vmatpush1.bf16.msra.mxu0 0
        %456 = vmatprep.subr.bf16.mxu0 0
        %457 = vmatpush1.bf16.msra.mxu0 0
        %458 = vmatprep.subr.bf16.mxu0 0
        %459 = vmatpush1.bf16.msra.mxu0 0
        %460 = vmatprep.subr.bf16.mxu0 0
        %461 = vmatpush1.bf16.msra.mxu0 0
        %462 = vmatprep.subr.bf16.mxu0 0
        %463 = vmatpush1.bf16.msra.mxu0 0
        %464 = vmatprep.subr.bf16.mxu0 0
        %465 = vmatpush1.bf16.msra.mxu0 0
        %466 = vmatprep.subr.bf16.mxu0 0
        %467 = vmatpush1.bf16.msra.mxu0 0
        %468 = vmatprep.subr.bf16.mxu0 0
        %469 = vmatpush1.bf16.msra.mxu0 0
        %470 = vmatprep.subr.bf16.mxu0 0
        %471 = vmatpush1.bf16.msra.mxu0 0
        %472 = vmatprep.subr.bf16.mxu0 0
        %473 = vmatpush1.bf16.msra.mxu0 0
        %474 = vmatprep.subr.bf16.mxu0 0
        %475 = vmatpush1.bf16.msra.mxu0 0
        %476 = vmatprep.subr.bf16.mxu0 0
        %477 = vmatpush1.bf16.msra.mxu0 0
        %478 = vmatprep.mubr.bf16.mxu0 0
        %479 = vmatmul.mubr.bf16.gmra.mrb[0].mxu0 %v444
        %v480 = vpop.f32.mrb[0].mxu0
        %v481 = vadd.f32 0.0, %v480
        %v482 = vpop.f32.mrb[0].mxu0
        %v483 = vpop.f32.mrb[0].mxu0
        %v484 = vpop.f32.mrb[0].mxu0
        %485 = vdwg.mxu0
        %v486 = vld [vmem:[%s3] sm:$0xf]
        %v487 = vld [vmem:[%s3 + $0x4] sm:$0xf]
        %v488 = vld [vmem:[%s3 + $0x8] sm:$0xf]
        %v489 = vld [vmem:[%s3 + $0xc] sm:$0xf]
        %v494 = vunpack.c.l.b16 %v486
        %v495 = vunpack.c.l.b16 %v487
        %v496 = vunpack.c.l.b16 %v488
        %v497 = vunpack.c.l.b16 %v489
        %v498 = vpack.c.b16 %v495, %v494
        %v499 = vpack.c.b16 %v497, %v496
        %502 = vmatprep.subr.bf16.mxu0 0
        %503 = vmatpush1.bf16.msra.mxu0 %v498
        %504 = vmatprep.subr.bf16.mxu0 0
        %505 = vmatpush1.bf16.msra.mxu0 %v499
        %506 = vmatprep.subr.bf16.mxu0 0
        %507 = vmatpush1.bf16.msra.mxu0 0
        %508 = vmatprep.subr.bf16.mxu0 0
        %509 = vmatpush1.bf16.msra.mxu0 0
        %510 = vmatprep.subr.bf16.mxu0 0
        %511 = vmatpush1.bf16.msra.mxu0 0
        %512 = vmatprep.subr.bf16.mxu0 0
        %513 = vmatpush1.bf16.msra.mxu0 0
        %514 = vmatprep.subr.bf16.mxu0 0
        %515 = vmatpush1.bf16.msra.mxu0 0
        %516 = vmatprep.subr.bf16.mxu0 0
        %517 = vmatpush1.bf16.msra.mxu0 0
        %518 = vmatprep.subr.bf16.mxu0 0
        %519 = vmatpush1.bf16.msra.mxu0 0
        %520 = vmatprep.subr.bf16.mxu0 0
        %521 = vmatpush1.bf16.msra.mxu0 0
        %522 = vmatprep.subr.bf16.mxu0 0
        %523 = vmatpush1.bf16.msra.mxu0 0
        %524 = vmatprep.subr.bf16.mxu0 0
        %525 = vmatpush1.bf16.msra.mxu0 0
        %526 = vmatprep.subr.bf16.mxu0 0
        %527 = vmatpush1.bf16.msra.mxu0 0
        %528 = vmatprep.subr.bf16.mxu0 0
        %529 = vmatpush1.bf16.msra.mxu0 0
        %530 = vmatprep.subr.bf16.mxu0 0
        %531 = vmatpush1.bf16.msra.mxu0 0
        %532 = vmatprep.subr.bf16.mxu0 0
        %533 = vmatpush1.bf16.msra.mxu0 0
        %534 = vmatprep.mubr.bf16.mxu0 0
        %535 = vmatmul.mubr.bf16.gmra.mrb[0].mxu0 %v444
        %v536 = vpop.f32.mrb[0].mxu0
        %v537 = vadd.f32 0.0, %v536
        %v538 = vpop.f32.mrb[0].mxu0
        %v539 = vpop.f32.mrb[0].mxu0
        %v540 = vpop.f32.mrb[0].mxu0
        %541 = vdwg.mxu0
        %v542 = vld [vmem:[#allocation5] sm:$0xf]
        %v543 = vld [vmem:[#allocation5 + $0x4] sm:$0xf]
        %v544 = vld [vmem:[#allocation5 + $0x8] sm:$0xf]
        %v545 = vld [vmem:[#allocation5 + $0xc] sm:$0xf]
        %v550 = vunpack.c.l.b16 %v542
        %v551 = vunpack.c.l.b16 %v543
        %v552 = vunpack.c.l.b16 %v544
        %v553 = vunpack.c.l.b16 %v545
        %v554 = vpack.c.b16 %v551, %v550
        %v555 = vpack.c.b16 %v553, %v552
        %558 = vmatprep.subr.bf16.mxu0 0
        %559 = vmatpush1.bf16.msra.mxu0 %v554
        %560 = vmatprep.subr.bf16.mxu0 0
        %561 = vmatpush1.bf16.msra.mxu0 %v555
        %562 = vmatprep.subr.bf16.mxu0 0
        %563 = vmatpush1.bf16.msra.mxu0 0
        %564 = vmatprep.subr.bf16.mxu0 0
        %565 = vmatpush1.bf16.msra.mxu0 0
        %566 = vmatprep.subr.bf16.mxu0 0
        %567 = vmatpush1.bf16.msra.mxu0 0
        %568 = vmatprep.subr.bf16.mxu0 0
        %569 = vmatpush1.bf16.msra.mxu0 0
        %570 = vmatprep.subr.bf16.mxu0 0
        %571 = vmatpush1.bf16.msra.mxu0 0
        %572 = vmatprep.subr.bf16.mxu0 0
        %573 = vmatpush1.bf16.msra.mxu0 0
        %574 = vmatprep.subr.bf16.mxu0 0
        %575 = vmatpush1.bf16.msra.mxu0 0
        %576 = vmatprep.subr.bf16.mxu0 0
        %577 = vmatpush1.bf16.msra.mxu0 0
        %578 = vmatprep.subr.bf16.mxu0 0
        %579 = vmatpush1.bf16.msra.mxu0 0
        %580 = vmatprep.subr.bf16.mxu0 0
        %581 = vmatpush1.bf16.msra.mxu0 0
        %582 = vmatprep.subr.bf16.mxu0 0
        %583 = vmatpush1.bf16.msra.mxu0 0
        %584 = vmatprep.subr.bf16.mxu0 0
        %585 = vmatpush1.bf16.msra.mxu0 0
        %586 = vmatprep.subr.bf16.mxu0 0
        %587 = vmatpush1.bf16.msra.mxu0 0
        %588 = vmatprep.subr.bf16.mxu0 0
        %589 = vmatpush1.bf16.msra.mxu0 0
        %590 = vmatprep.mubr.bf16.mxu0 0
        %591 = vmatmul.mubr.bf16.gmra.mrb[0].mxu0 %v444
        %v592 = vpop.f32.mrb[0].mxu0
        %v593 = vadd.f32 0.0, %v592
        %v594 = vpop.f32.mrb[0].mxu0
        %v595 = vpop.f32.mrb[0].mxu0
        %v596 = vpop.f32.mrb[0].mxu0
        %597 = vdwg.mxu0
        %v598 = vpack.c.bf16 %v593, %v593
        %vm599 = vcmask 257024
        %600 = vst.msk [vmem:[%s397] sm:$0xf] %vm599, %v598
        %s601 = scalar_lea.vmem %s5, %s406
        %v602 = vld [vmem:[%s601] sm:$0xff]
        %s603 = scalar_lea.vmem %s6, %s406
        %v604 = vld [vmem:[%s603] sm:$0xff]
        %v605 = vmul.f32 %v481, %v602
        %607 = vrot.lane.b32.xlu0 %v604, 4
        %v608 = vpop.permute.xlu0 %607
        %v610 = vmul.f32 %v481, %v608
        %612 = vrot.lane.b32.xlu0 %v610, 124
        %v613 = vpop.permute.xlu0 %612
        %v615 = vsub.f32 %v605, %v613
        %v616 = vpack.c.bf16 %v615, %v615
        %vm617 = vcmask 27648
        %618 = vst.msk [vmem:[%s383] sm:$0xf] %vm617, %v616
        %620 = vrot.lane.b32.xlu0 %v602, 4
        %v621 = vpop.permute.xlu0 %620
        %v623 = vmul.f32 %v481, %v621
        %v624 = vmul.f32 %v481, %v604
        %626 = vrot.lane.b32.xlu0 %v624, 4
        %v627 = vpop.permute.xlu0 %626
        %v629 = vadd.f32 %v623, %v627
        %v630 = vpack.c.bf16 %v629, %v629
        %vm631 = vcmask 60448
        %632 = vst.msk [vmem:[%s383] sm:$0xf] %vm631, %v630
        %v633 = vmul.f32 %v537, %v602
        %v634 = vmul.f32 %v537, %v608
        %636 = vrot.lane.b32.xlu0 %v634, 124
        %v637 = vpop.permute.xlu0 %636
        %v639 = vsub.f32 %v633, %v637
        %v640 = vpack.c.bf16 %v639, %v639
        %641 = vst.msk [vmem:[%s390] sm:$0xf] %vm617, %v640
        %v642 = vmul.f32 %v537, %v621
        %v643 = vmul.f32 %v537, %v604
        %645 = vrot.lane.b32.xlu0 %v643, 4
        %v646 = vpop.permute.xlu0 %645
        %v648 = vadd.f32 %v642, %v646
        %v649 = vpack.c.bf16 %v648, %v648
        %650 = vst.msk [vmem:[%s390] sm:$0xf] %vm631, %v649
        %651 = vrot.lane.b32.xlu0 %v602, 8
        %v652 = vpop.permute.xlu0 %651
        %v654 = vmul.f32 %v481, %v652
        %655 = vrot.lane.b32.xlu0 %v604, 12
        %v656 = vpop.permute.xlu0 %655
        %v658 = vmul.f32 %v481, %v656
        %660 = vrot.lane.b32.xlu0 %v658, 124
        %v661 = vpop.permute.xlu0 %660
        %v663 = vsub.f32 %v654, %v661
        %v664 = vpack.c.bf16 %v663, %v663
        %vm665 = vcmask 93248
        %666 = vst.msk [vmem:[%s383] sm:$0xf] %vm665, %v664
        %667 = vrot.lane.b32.xlu0 %v602, 12
        %v668 = vpop.permute.xlu0 %667
        %v670 = vmul.f32 %v481, %v668
        %671 = vrot.lane.b32.xlu0 %v604, 8
        %v672 = vpop.permute.xlu0 %671
        %v674 = vmul.f32 %v481, %v672
        %676 = vrot.lane.b32.xlu0 %v674, 4
        %v677 = vpop.permute.xlu0 %676
        %v679 = vadd.f32 %v670, %v677
        %v680 = vpack.c.bf16 %v679, %v679
        %vm681 = vcmask 126048
        %682 = vst.msk [vmem:[%s383] sm:$0xf] %vm681, %v680
        %v683 = vmul.f32 %v537, %v652
        %v684 = vmul.f32 %v537, %v656
        %686 = vrot.lane.b32.xlu0 %v684, 124
        %v687 = vpop.permute.xlu0 %686
        %v689 = vsub.f32 %v683, %v687
        %v690 = vpack.c.bf16 %v689, %v689
        %691 = vst.msk [vmem:[%s390] sm:$0xf] %vm665, %v690
        %v692 = vmul.f32 %v537, %v668
        %v693 = vmul.f32 %v537, %v672
        %695 = vrot.lane.b32.xlu0 %v693, 4
        %v696 = vpop.permute.xlu0 %695
        %v698 = vadd.f32 %v692, %v696
        %v699 = vpack.c.bf16 %v698, %v698
        %700 = vst.msk [vmem:[%s390] sm:$0xf] %vm681, %v699
        %701 = vrot.lane.b32.xlu0 %v602, 16
        %v702 = vpop.permute.xlu0 %701
        %v704 = vmul.f32 %v481, %v702
        %705 = vrot.lane.b32.xlu0 %v604, 20
        %v706 = vpop.permute.xlu0 %705
        %v708 = vmul.f32 %v481, %v706
        %710 = vrot.lane.b32.xlu0 %v708, 124
        %v711 = vpop.permute.xlu0 %710
        %v713 = vsub.f32 %v704, %v711
        %v714 = vpack.c.bf16 %v713, %v713
        %vm715 = vcmask 158848
        %716 = vst.msk [vmem:[%s383] sm:$0xf] %vm715, %v714
        %717 = vrot.lane.b32.xlu0 %v602, 20
        %v718 = vpop.permute.xlu0 %717
        %v720 = vmul.f32 %v481, %v718
        %721 = vrot.lane.b32.xlu0 %v604, 16
        %v722 = vpop.permute.xlu0 %721
        %v724 = vmul.f32 %v481, %v722
        %726 = vrot.lane.b32.xlu0 %v724, 4
        %v727 = vpop.permute.xlu0 %726
        %v729 = vadd.f32 %v720, %v727
        %v730 = vpack.c.bf16 %v729, %v729
        %vm731 = vcmask 191648
        %732 = vst.msk [vmem:[%s383] sm:$0xf] %vm731, %v730
        %v733 = vmul.f32 %v537, %v702
        %v734 = vmul.f32 %v537, %v706
        %736 = vrot.lane.b32.xlu0 %v734, 124
        %v737 = vpop.permute.xlu0 %736
        %v739 = vsub.f32 %v733, %v737
        %v740 = vpack.c.bf16 %v739, %v739
        %741 = vst.msk [vmem:[%s390] sm:$0xf] %vm715, %v740
        %v742 = vmul.f32 %v537, %v718
        %v743 = vmul.f32 %v537, %v722
        %745 = vrot.lane.b32.xlu0 %v743, 4
        %v746 = vpop.permute.xlu0 %745
        %v748 = vadd.f32 %v742, %v746
        %v749 = vpack.c.bf16 %v748, %v748
        %750 = vst.msk [vmem:[%s390] sm:$0xf] %vm731, %v749
        %751 = vrot.lane.b32.xlu0 %v602, 24
        %v752 = vpop.permute.xlu0 %751
        %v754 = vmul.f32 %v481, %v752
        %755 = vrot.lane.b32.xlu0 %v604, 28
        %v756 = vpop.permute.xlu0 %755
        %v758 = vmul.f32 %v481, %v756
        %760 = vrot.lane.b32.xlu0 %v758, 124
        %v761 = vpop.permute.xlu0 %760
        %v763 = vsub.f32 %v754, %v761
        %v764 = vpack.c.bf16 %v763, %v763
        %vm765 = vcmask 224448
        %766 = vst.msk [vmem:[%s383] sm:$0xf] %vm765, %v764
        %767 = vrot.lane.b32.xlu0 %v602, 28
        %v768 = vpop.permute.xlu0 %767
        %v770 = vmul.f32 %v481, %v768
        %771 = vrot.lane.b32.xlu0 %v604, 24
        %v772 = vpop.permute.xlu0 %771
        %v774 = vmul.f32 %v481, %v772
        %776 = vrot.lane.b32.xlu0 %v774, 4
        %v777 = vpop.permute.xlu0 %776
        %v779 = vadd.f32 %v770, %v777
        %v780 = vpack.c.bf16 %v779, %v779
        %vm781 = vcmask 257248
        %782 = vst.msk [vmem:[%s383] sm:$0xf] %vm781, %v780
        %v783 = vmul.f32 %v537, %v752
        %v784 = vmul.f32 %v537, %v756
        %786 = vrot.lane.b32.xlu0 %v784, 124
        %v787 = vpop.permute.xlu0 %786
        %v789 = vsub.f32 %v783, %v787
        %v790 = vpack.c.bf16 %v789, %v789
        %791 = vst.msk [vmem:[%s390] sm:$0xf] %vm765, %v790
        %v792 = vmul.f32 %v537, %v768
        %v793 = vmul.f32 %v537, %v772
        %795 = vrot.lane.b32.xlu0 %v793, 4
        %v796 = vpop.permute.xlu0 %795
        %v798 = vadd.f32 %v792, %v796
        %v799 = vpack.c.bf16 %v798, %v798
        %800 = vst.msk [vmem:[%s390] sm:$0xf] %vm781, %v799
        %s801 = sand.u32 %s205, 1
        %s802 = scalar_lea.sflag [#allocation4], %s801
        %s803 = sand.u32 %s205, 1
        %s804 = smul.addr %s803, 4
        %s805 = scalar_lea.vmem [#allocation7], %s804
        %s806 = sand.u32 %s29, 1
        %s807 = scalar_lea.sflag [#allocation9], %s806
        %s808 = sand.u32 %s233, 1
        %s809 = smul.addr %s808, 4
        %s810 = scalar_lea.vmem [#allocation8], %s809
        %s811 = sand.u32 %s29, 1
        %s812 = scalar_lea.sflag [#allocation9], %s811
        %s813 = sand.u32 %s261, 1
        %s814 = smul.addr %s813, 4
        %s815 = scalar_lea.vmem [#allocation10], %s814
        // Predicated region
        $region57: #{tpu_custom_call.1} parent=47 // pred_check
          %p816 = pneg %p215
        $region58: #{tpu_custom_call.1} parent=47 // pred_check_branch
          %818 = sbr.rel (%p816) target = $region60
        $region59: #{tpu_custom_call.1} parent=47 // pred_region
          %s820 = ssub.s32 64, 64
          %821 = vsyncadd %s802, %s820
          %s822 = sadd.s32 %s34, %s33
          %s823 = smul.addr %s822, 64
          %s824 = scalar_lea.hbm %s7, %s823
          %s826 = sshll.u32 %s805, 4
          %s827 = int_to_ptr.vmem [resolvable:$true] %s826
          %829 = dma.vmem_to_hbm [thread:$0]  %s827, 64, %s824, %s802
        $region60: #{tpu_custom_call.1} parent=47 // pred_fallthru
          _
        // Predicated region
        $region61: #{tpu_custom_call.1} parent=47 // pred_check
          %p830 = pneg %p243
        $region62: #{tpu_custom_call.1} parent=47 // pred_check_branch
          %832 = sbr.rel (%p830) target = $region64
        $region63: #{tpu_custom_call.1} parent=47 // pred_region
          %s834 = ssub.s32 64, 64
          %835 = vsyncadd %s807, %s834
          %s836 = sadd.s32 %s34, %s33
          %s837 = smul.addr %s836, 64
          %s838 = scalar_lea.hbm %s8, %s837
          %s840 = sshll.u32 %s810, 4
          %s841 = int_to_ptr.vmem [resolvable:$true] %s840
          %843 = dma.vmem_to_hbm [thread:$0]  %s841, 64, %s838, %s807
        $region64: #{tpu_custom_call.1} parent=47 // pred_fallthru
          _
        // Predicated region
        $region65: #{tpu_custom_call.1} parent=47 // pred_check
          %p844 = pneg %p271
        $region66: #{tpu_custom_call.1} parent=47 // pred_check_branch
          %846 = sbr.rel (%p844) target = $region68
        $region67: #{tpu_custom_call.1} parent=47 // pred_region
          %s848 = ssub.s32 64, 64
          %849 = vsyncadd %s812, %s848
          %s850 = sadd.s32 %s34, %s33
          %s851 = smul.addr %s850, 64
          %s852 = scalar_lea.hbm %s9, %s851
          %s854 = sshll.u32 %s815, 4
          %s855 = int_to_ptr.vmem [resolvable:$true] %s854
          %857 = dma.vmem_to_hbm [thread:$0]  %s855, 64, %s852, %s812
        $region68: #{tpu_custom_call.1} parent=47 // pred_fallthru
          _
      $region48: #{tpu_custom_call.1} parent=5 // pred_fallthru
        _
      %p858 = scmp.le.s32.totalorder 2, %s24
      // Predicated region
      $region69: #{tpu_custom_call.1} parent=5 // pred_check
        %p859 = pneg %p858
      $region70: #{tpu_custom_call.1} parent=5 // pred_check_branch
        %861 = sbr.rel (%p859) target = $region72
      $region71: #{tpu_custom_call.1} parent=5 // pred_region
        %s862 = ssub.s32 %s24, 2
        // Predicated region
        $region73: #{tpu_custom_call.1} parent=71 // pred_check
          %p863 = pneg %p221
        $region74: #{tpu_custom_call.1} parent=71 // pred_check_branch
          %865 = sbr.rel (%p863) target = $region76
        $region75: #{tpu_custom_call.1} parent=71 // pred_region
          %s866 = sand.u32 %s206, 1
          %s867 = scalar_lea.sflag [#allocation4], %s866
          %s868 = sand.u32 %s206, 1
          %s869 = smul.addr %s868, 4
          %s870 = scalar_lea.vmem [#allocation7], %s869
          %871 = dma.done %s867, 64
        $region76: #{tpu_custom_call.1} parent=71 // pred_fallthru
          _
        // Predicated region
        $region77: #{tpu_custom_call.1} parent=71 // pred_check
          %p872 = pneg %p249
        $region78: #{tpu_custom_call.1} parent=71 // pred_check_branch
          %874 = sbr.rel (%p872) target = $region80
        $region79: #{tpu_custom_call.1} parent=71 // pred_region
          %s875 = sand.u32 %s30, 1
          %s876 = scalar_lea.sflag [#allocation9], %s875
          %s877 = sand.u32 %s234, 1
          %s878 = smul.addr %s877, 4
          %s879 = scalar_lea.vmem [#allocation8], %s878
          %880 = dma.done %s876, 64
        $region80: #{tpu_custom_call.1} parent=71 // pred_fallthru
          _
        // Predicated region
        $region81: #{tpu_custom_call.1} parent=71 // pred_check
          %p881 = pneg %p277
        $region82: #{tpu_custom_call.1} parent=71 // pred_check_branch
          %883 = sbr.rel (%p881) target = $region84
        $region83: #{tpu_custom_call.1} parent=71 // pred_region
          %s884 = sand.u32 %s30, 1
          %s885 = scalar_lea.sflag [#allocation9], %s884
          %s886 = sand.u32 %s262, 1
          %s887 = smul.addr %s886, 4
          %s888 = scalar_lea.vmem [#allocation10], %s887
          %889 = dma.done %s885, 64
        $region84: #{tpu_custom_call.1} parent=71 // pred_fallthru
          _
      $region72: #{tpu_custom_call.1} parent=5 // pred_fallthru
        _
    $region6: #{tpu_custom_call.1} parent=1 // loop_footer
      %s28 = sadd.s32 1, %s24
    $region7: #{tpu_custom_call.1} parent=1 // loop_footer_branch
      %23 = sbr.rel target = $region3
    $region8: #{tpu_custom_call.1} parent=1 // loop_exit
      _
    %890 = vsyncpa [#allocation3], 1
    %s891 = scalar_lea.sflag [#allocation3], 1
    %892 = vsyncpa %s891, 1
    %893 = vsyncpa [#allocation6], 1
    %894 = vsyncpa [#allocation4], 1
    %s895 = scalar_lea.sflag [#allocation4], 1
    %896 = vsyncpa %s895, 1
    %897 = vsyncpa [#allocation9], 1
    %s898 = scalar_lea.sflag [#allocation9], 1
    %899 = vsyncpa %s898, 1

</llo_original>
